<compile_context>
chip_gen: v5e
topology: v5e:2x2
jax: 0.10.0
libtpu: 0.0.40
codegen_flags: <defaults>
</compile_context>

<pallas_src>
import functools

import jax
import jax.numpy as jnp
import numpy as np
from jax.experimental import pallas as pl
from jax.experimental.pallas import tpu as pltpu


def _contrastive_kernel(wk_ref, wp_ref, x_ref, out_ref, acc_ref, *,
                        margin, denom, cam):
    n = pl.program_id(0)

    @pl.when(n == 0)
    def _():
        acc_ref[...] = jnp.zeros_like(acc_ref)

    # Load each camera slab once; upcast AFTER the DMA so bf16 inputs do not
    # double HBM read bytes (free when the input is already f32).
    xs = [x_ref[:, c].astype(jnp.float32) for c in range(cam)]  # cam x (TB, fr, feat)

    partial = jnp.zeros(acc_ref.shape, dtype=jnp.float32)       # (TB, fr)
    for i in range(cam):
        for j in range(i + 1, cam):
            w_keep = wk_ref[i * cam + j]                         # SMEM scalar
            w_push = wp_ref[i * cam + j]                         # SMEM scalar
            diff = xs[i] - xs[j]                                 # (TB, fr, feat)
            # Direct pairwise distance (matches torch.cdist p=2, no Gram
            # cancellation).  d2 >= 0 by construction, so no clamp needed.
            dist = jnp.sqrt(jnp.sum(diff * diff, axis=-1))       # (TB, fr)
            partial = partial + (w_keep * dist
                                 + w_push * jnp.maximum(margin - dist, 0.0))

    # Per-lane accumulation only; no cross-lane reduce / masked scalar store
    # on the per-step critical path.
    acc_ref[...] += partial

    @pl.when(n == pl.num_programs(0) - 1)
    def _():
        out_ref[...] = jnp.sum(acc_ref[...], keepdims=True) / denom


def contrastive_loss(pred_features, target, *, margin, alpha=10.0,
                     vmem_budget_bytes=8 << 20):
    """pred_features: (B, cam, fr, feat); target: (B, cam, fr). Returns scalar."""
    B, cam, fr, feat = pred_features.shape

    # torch: target.view(-1, cam).nonzero()[:, 1] then zero those rows/cols of
    # EVERY batch*frame slice -> camera c is "selected" iff any entry of
    # target for camera c (over batch and frame) is nonzero.
    not_sel = jnp.logical_not(jnp.any(target != 0, axis=(0, 2))).astype(jnp.float32)
    keep = not_sel[:, None] * not_sel[None, :]                    # (cam, cam)

    # Fold the selection mask, alpha and the strict-upper-triangular mask
    # (diagonal is masked_fill'ed to 0 in torch, so it never contributes to
    # the sum) into two constant weight vectors.
    triu_strict = np.triu(np.ones((cam, cam), np.float32), k=1)
    w_keep = (keep * triu_strict).reshape(cam * cam)
    w_push = (alpha * (1.0 - keep) * triu_strict).reshape(cam * cam)

    N = B * fr
    denom = float(N * cam * (cam + 1) // 2)   # mean over upper-tri incl. diag

    # Pick the batch tile so the (double-buffered) input block stays within a
    # conservative VMEM budget (safe for v7x's 64 MiB physical VMEM too).
    itemsize = jnp.dtype(pred_features.dtype).itemsize
    per_b = cam * fr * feat * itemsize
    max_tb = max(1, int(vmem_budget_bytes // (2 * per_b)))
    tb = 1
    for d in range(1, B + 1):
        if B % d == 0 and d <= max_tb:
            tb = d
    # TODO(synk): also tile the fr axis if a single (1, cam, fr, feat) block
    # ever exceeds the VMEM budget (not needed at these shapes).

    kernel = functools.partial(_contrastive_kernel, margin=float(margin),
                               denom=denom, cam=cam)

    out = pl.pallas_call(
        kernel,
        out_shape=jax.ShapeDtypeStruct((1, 1), jnp.float32),
        grid_spec=pltpu.PrefetchScalarGridSpec(
            num_scalar_prefetch=0,
            grid=(B // tb,),
            in_specs=[
                pl.BlockSpec(memory_space=pltpu.MemorySpace.SMEM),   # w_keep
                pl.BlockSpec(memory_space=pltpu.MemorySpace.SMEM),   # w_push
                # Trailing (fr, feat) are full-array dims -> no transpose,
                # no (8,128) violation.
                pl.BlockSpec((tb, cam, fr, feat), lambda n: (n, 0, 0, 0)),
            ],
            out_specs=pl.BlockSpec((1, 1), lambda n: (0, 0)),
            scratch_shapes=[pltpu.VMEM((tb, fr), jnp.float32)],
        ),
        compiler_params=pltpu.CompilerParams(
            dimension_semantics=("arbitrary",)),
    )(w_keep, w_push, pred_features)
    return out[0, 0]


def contrastive_loss_ref(pred_features, target, margin, alpha=10.0):
    """Pure-JAX mirror of the PyTorch forward, for verification."""
    B, cam, fr, feat = pred_features.shape
    x = jnp.transpose(pred_features, (0, 2, 1, 3)).reshape(B * fr, cam, feat)
    t = jnp.transpose(target, (0, 2, 1)).reshape(B * fr, cam)

    diff = x[:, :, None, :] - x[:, None, :, :]
    dist = jnp.sqrt(jnp.maximum(jnp.sum(diff * diff, axis=-1), 0.0))

    sel = jnp.any(t != 0, axis=0)
    keep = ((~sel)[:, None] & (~sel)[None, :]).astype(jnp.float32)
    loss = keep * dist + alpha * (1.0 - keep) * jnp.maximum(margin - dist, 0.0)
    loss = jnp.where(jnp.eye(cam, dtype=bool), 0.0, loss)

    triu_mask = np.triu(np.ones((cam, cam))) == 1
    return jnp.mean(loss[:, triu_mask])


if __name__ == "__main__":
    key = jax.random.PRNGKey(0)
    B, cam, fr, feat = 2, 4, 8, 32
    k1, k2 = jax.random.split(key)

    pred_features = jax.random.normal(k1, (B, cam, fr, feat), dtype=jnp.float32)

    # One-hot camera selection per (batch, frame), restricted to cameras {0, 2}
    # so both branches of the loss (keep vs. push-apart) fire.
    hot = jax.random.randint(k2, (B, fr), 0, 2) * 2
    target = jnp.transpose(jax.nn.one_hot(hot, cam, dtype=jnp.float32), (0, 2, 1))

    margin, alpha = 1.0, 10.0

    out = contrastive_loss(pred_features, target, margin=margin, alpha=alpha)
    out = jax.block_until_ready(out)

    ref = contrastive_loss_ref(pred_features, target, margin, alpha)
    np.testing.assert_allclose(np.asarray(out), np.asarray(ref), rtol=1e-4, atol=1e-5)

    print("KERNEL_OK")
</pallas_src>

<mosaic_0001>
module attributes {stable_mosaic.version = 11 : i64} {
  func.func @_contrastive_kernel(%arg0: i32, %arg1: memref<16xf32, #tpu.memory_space<smem>>, %arg2: memref<16xf32, #tpu.memory_space<smem>>, %arg3: memref<2x4x8x32xf32, #tpu.memory_space<vmem>>, %arg4: memref<1x1xf32, #tpu.memory_space<vmem>>, %arg5: memref<2x8xf32, #tpu.memory_space<vmem>>) attributes {dimension_semantics = [#tpu.dimension_semantics<arbitrary>], iteration_bounds = array<i64: 1>, scalar_prefetch = 0 : i64, scratch_operands = 1 : i64, tpu.core_type = #tpu.core_type<tc>, window_params = [{transform_indices = @transform_0, window_bounds = array<i64: 16>}, {transform_indices = @transform_1, window_bounds = array<i64: 16>}, {transform_indices = @transform_2, window_bounds = array<i64: 2, 4, 8, 32>}, {pipeline_mode = #tpu.pipeline_mode<synchronous>, transform_indices = @transform_3, window_bounds = array<i64: 1, 1>}]} {
    %c0_i32 = arith.constant 0 : i32
    %0 = arith.cmpi eq, %arg0, %c0_i32 : i32
    %1 = arith.extui %0 : i1 to i32
    %c0_i32_0 = arith.constant 0 : i32
    %2 = arith.cmpi ne, %1, %c0_i32_0 : i32
    scf.if %2 {
      %cst_46 = arith.constant 0.000000e+00 : f32
      %114 = vector.broadcast %cst_46 : f32 to vector<2x8xf32>
      %c0_47 = arith.constant 0 : index
      %c0_48 = arith.constant 0 : index
      %115 = vector.load %arg5[%c0_47, %c0_48] : memref<2x8xf32, #tpu.memory_space<vmem>>, vector<2x8xf32>
      tpu.vector_store %arg5[%c0_47, %c0_48], %114 {strides = array<i32>} : memref<2x8xf32, #tpu.memory_space<vmem>>, vector<2x8xf32>,
    } else {
    }
    %c0 = arith.constant 0 : index
    %c0_1 = arith.constant 0 : index
    %c0_2 = arith.constant 0 : index
    %c0_3 = arith.constant 0 : index
    %3 = vector.load %arg3[%c0, %c0_1, %c0_2, %c0_3] : memref<2x4x8x32xf32, #tpu.memory_space<vmem>>, vector<2x1x8x32xf32>
    %4 = vector.shape_cast %3 : vector<2x1x8x32xf32> to vector<2x8x32xf32>
    %c0_4 = arith.constant 0 : index
    %c1 = arith.constant 1 : index
    %c0_5 = arith.constant 0 : index
    %c0_6 = arith.constant 0 : index
    %5 = vector.load %arg3[%c0_4, %c1, %c0_5, %c0_6] : memref<2x4x8x32xf32, #tpu.memory_space<vmem>>, vector<2x1x8x32xf32>
    %6 = vector.shape_cast %5 : vector<2x1x8x32xf32> to vector<2x8x32xf32>
    %c0_7 = arith.constant 0 : index
    %c2 = arith.constant 2 : index
    %c0_8 = arith.constant 0 : index
    %c0_9 = arith.constant 0 : index
    %7 = vector.load %arg3[%c0_7, %c2, %c0_8, %c0_9] : memref<2x4x8x32xf32, #tpu.memory_space<vmem>>, vector<2x1x8x32xf32>
    %8 = vector.shape_cast %7 : vector<2x1x8x32xf32> to vector<2x8x32xf32>
    %c0_10 = arith.constant 0 : index
    %c3 = arith.constant 3 : index
    %c0_11 = arith.constant 0 : index
    %c0_12 = arith.constant 0 : index
    %9 = vector.load %arg3[%c0_10, %c3, %c0_11, %c0_12] : memref<2x4x8x32xf32, #tpu.memory_space<vmem>>, vector<2x1x8x32xf32>
    %10 = vector.shape_cast %9 : vector<2x1x8x32xf32> to vector<2x8x32xf32>
    %cst = arith.constant 0.000000e+00 : f32
    %11 = vector.broadcast %cst : f32 to vector<2x8xf32>
    %c1_13 = arith.constant 1 : index
    %12 = memref.load %arg1[%c1_13] : memref<16xf32, #tpu.memory_space<smem>>
    %c1_14 = arith.constant 1 : index
    %13 = memref.load %arg2[%c1_14] : memref<16xf32, #tpu.memory_space<smem>>
    %14 = arith.subf %4, %6 : vector<2x8x32xf32>
    %15 = arith.mulf %14, %14 : vector<2x8x32xf32>
    %cst_15 = arith.constant dense<0.000000e+00> : vector<2x8xf32>
    %16 = vector.multi_reduction <add>, %15, %cst_15 [2] : vector<2x8x32xf32> to vector<2x8xf32>
    %17 = math.sqrt %16 : vector<2x8xf32>
    %18 = vector.broadcast %12 : f32 to vector<2x8xf32>
    %19 = arith.mulf %18, %17 : vector<2x8xf32>
    %cst_16 = arith.constant 1.000000e+00 : f32
    %20 = vector.broadcast %cst_16 : f32 to vector<2x8xf32>
    %21 = arith.subf %20, %17 : vector<2x8xf32>
    %cst_17 = arith.constant 0.000000e+00 : f32
    %22 = vector.broadcast %cst_17 : f32 to vector<2x8xf32>
    %23 = arith.maximumf %21, %22 : vector<2x8xf32>
    %24 = vector.broadcast %13 : f32 to vector<2x8xf32>
    %25 = arith.mulf %24, %23 : vector<2x8xf32>
    %26 = arith.addf %19, %25 : vector<2x8xf32>
    %27 = arith.addf %11, %26 : vector<2x8xf32>
    %c2_18 = arith.constant 2 : index
    %28 = memref.load %arg1[%c2_18] : memref<16xf32, #tpu.memory_space<smem>>
    %c2_19 = arith.constant 2 : index
    %29 = memref.load %arg2[%c2_19] : memref<16xf32, #tpu.memory_space<smem>>
    %30 = arith.subf %4, %8 : vector<2x8x32xf32>
    %31 = arith.mulf %30, %30 : vector<2x8x32xf32>
    %cst_20 = arith.constant dense<0.000000e+00> : vector<2x8xf32>
    %32 = vector.multi_reduction <add>, %31, %cst_20 [2] : vector<2x8x32xf32> to vector<2x8xf32>
    %33 = math.sqrt %32 : vector<2x8xf32>
    %34 = vector.broadcast %28 : f32 to vector<2x8xf32>
    %35 = arith.mulf %34, %33 : vector<2x8xf32>
    %cst_21 = arith.constant 1.000000e+00 : f32
    %36 = vector.broadcast %cst_21 : f32 to vector<2x8xf32>
    %37 = arith.subf %36, %33 : vector<2x8xf32>
    %cst_22 = arith.constant 0.000000e+00 : f32
    %38 = vector.broadcast %cst_22 : f32 to vector<2x8xf32>
    %39 = arith.maximumf %37, %38 : vector<2x8xf32>
    %40 = vector.broadcast %29 : f32 to vector<2x8xf32>
    %41 = arith.mulf %40, %39 : vector<2x8xf32>
    %42 = arith.addf %35, %41 : vector<2x8xf32>
    %43 = arith.addf %27, %42 : vector<2x8xf32>
    %c3_23 = arith.constant 3 : index
    %44 = memref.load %arg1[%c3_23] : memref<16xf32, #tpu.memory_space<smem>>
    %c3_24 = arith.constant 3 : index
    %45 = memref.load %arg2[%c3_24] : memref<16xf32, #tpu.memory_space<smem>>
    %46 = arith.subf %4, %10 : vector<2x8x32xf32>
    %47 = arith.mulf %46, %46 : vector<2x8x32xf32>
    %cst_25 = arith.constant dense<0.000000e+00> : vector<2x8xf32>
    %48 = vector.multi_reduction <add>, %47, %cst_25 [2] : vector<2x8x32xf32> to vector<2x8xf32>
    %49 = math.sqrt %48 : vector<2x8xf32>
    %50 = vector.broadcast %44 : f32 to vector<2x8xf32>
    %51 = arith.mulf %50, %49 : vector<2x8xf32>
    %cst_26 = arith.constant 1.000000e+00 : f32
    %52 = vector.broadcast %cst_26 : f32 to vector<2x8xf32>
    %53 = arith.subf %52, %49 : vector<2x8xf32>
    %cst_27 = arith.constant 0.000000e+00 : f32
    %54 = vector.broadcast %cst_27 : f32 to vector<2x8xf32>
    %55 = arith.maximumf %53, %54 : vector<2x8xf32>
    %56 = vector.broadcast %45 : f32 to vector<2x8xf32>
    %57 = arith.mulf %56, %55 : vector<2x8xf32>
    %58 = arith.addf %51, %57 : vector<2x8xf32>
    %59 = arith.addf %43, %58 : vector<2x8xf32>
    %c6 = arith.constant 6 : index
    %60 = memref.load %arg1[%c6] : memref<16xf32, #tpu.memory_space<smem>>
    %c6_28 = arith.constant 6 : index
    %61 = memref.load %arg2[%c6_28] : memref<16xf32, #tpu.memory_space<smem>>
    %62 = arith.subf %6, %8 : vector<2x8x32xf32>
    %63 = arith.mulf %62, %62 : vector<2x8x32xf32>
    %cst_29 = arith.constant dense<0.000000e+00> : vector<2x8xf32>
    %64 = vector.multi_reduction <add>, %63, %cst_29 [2] : vector<2x8x32xf32> to vector<2x8xf32>
    %65 = math.sqrt %64 : vector<2x8xf32>
    %66 = vector.broadcast %60 : f32 to vector<2x8xf32>
    %67 = arith.mulf %66, %65 : vector<2x8xf32>
    %cst_30 = arith.constant 1.000000e+00 : f32
    %68 = vector.broadcast %cst_30 : f32 to vector<2x8xf32>
    %69 = arith.subf %68, %65 : vector<2x8xf32>
    %cst_31 = arith.constant 0.000000e+00 : f32
    %70 = vector.broadcast %cst_31 : f32 to vector<2x8xf32>
    %71 = arith.maximumf %69, %70 : vector<2x8xf32>
    %72 = vector.broadcast %61 : f32 to vector<2x8xf32>
    %73 = arith.mulf %72, %71 : vector<2x8xf32>
    %74 = arith.addf %67, %73 : vector<2x8xf32>
    %75 = arith.addf %59, %74 : vector<2x8xf32>
    %c7 = arith.constant 7 : index
    %76 = memref.load %arg1[%c7] : memref<16xf32, #tpu.memory_space<smem>>
    %c7_32 = arith.constant 7 : index
    %77 = memref.load %arg2[%c7_32] : memref<16xf32, #tpu.memory_space<smem>>
    %78 = arith.subf %6, %10 : vector<2x8x32xf32>
    %79 = arith.mulf %78, %78 : vector<2x8x32xf32>
    %cst_33 = arith.constant dense<0.000000e+00> : vector<2x8xf32>
    %80 = vector.multi_reduction <add>, %79, %cst_33 [2] : vector<2x8x32xf32> to vector<2x8xf32>
    %81 = math.sqrt %80 : vector<2x8xf32>
    %82 = vector.broadcast %76 : f32 to vector<2x8xf32>
    %83 = arith.mulf %82, %81 : vector<2x8xf32>
    %cst_34 = arith.constant 1.000000e+00 : f32
    %84 = vector.broadcast %cst_34 : f32 to vector<2x8xf32>
    %85 = arith.subf %84, %81 : vector<2x8xf32>
    %cst_35 = arith.constant 0.000000e+00 : f32
    %86 = vector.broadcast %cst_35 : f32 to vector<2x8xf32>
    %87 = arith.maximumf %85, %86 : vector<2x8xf32>
    %88 = vector.broadcast %77 : f32 to vector<2x8xf32>
    %89 = arith.mulf %88, %87 : vector<2x8xf32>
    %90 = arith.addf %83, %89 : vector<2x8xf32>
    %91 = arith.addf %75, %90 : vector<2x8xf32>
    %c11 = arith.constant 11 : index
    %92 = memref.load %arg1[%c11] : memref<16xf32, #tpu.memory_space<smem>>
    %c11_36 = arith.constant 11 : index
    %93 = memref.load %arg2[%c11_36] : memref<16xf32, #tpu.memory_space<smem>>
    %94 = arith.subf %8, %10 : vector<2x8x32xf32>
    %95 = arith.mulf %94, %94 : vector<2x8x32xf32>
    %cst_37 = arith.constant dense<0.000000e+00> : vector<2x8xf32>
    %96 = vector.multi_reduction <add>, %95, %cst_37 [2] : vector<2x8x32xf32> to vector<2x8xf32>
    %97 = math.sqrt %96 : vector<2x8xf32>
    %98 = vector.broadcast %92 : f32 to vector<2x8xf32>
    %99 = arith.mulf %98, %97 : vector<2x8xf32>
    %cst_38 = arith.constant 1.000000e+00 : f32
    %100 = vector.broadcast %cst_38 : f32 to vector<2x8xf32>
    %101 = arith.subf %100, %97 : vector<2x8xf32>
    %cst_39 = arith.constant 0.000000e+00 : f32
    %102 = vector.broadcast %cst_39 : f32 to vector<2x8xf32>
    %103 = arith.maximumf %101, %102 : vector<2x8xf32>
    %104 = vector.broadcast %93 : f32 to vector<2x8xf32>
    %105 = arith.mulf %104, %103 : vector<2x8xf32>
    %106 = arith.addf %99, %105 : vector<2x8xf32>
    %107 = arith.addf %91, %106 : vector<2x8xf32>
    %c0_40 = arith.constant 0 : index
    %c0_41 = arith.constant 0 : index
    %108 = vector.load %arg5[%c0_40, %c0_41] : memref<2x8xf32, #tpu.memory_space<vmem>>, vector<2x8xf32>
    %109 = arith.addf %108, %107 : vector<2x8xf32>
    %c0_42 = arith.constant 0 : index
    %c0_43 = arith.constant 0 : index
    %110 = vector.load %arg5[%c0_42, %c0_43] : memref<2x8xf32, #tpu.memory_space<vmem>>, vector<2x8xf32>
    tpu.vector_store %arg5[%c0_42, %c0_43], %109 {strides = array<i32>} : memref<2x8xf32, #tpu.memory_space<vmem>>, vector<2x8xf32>,
    %c0_i32_44 = arith.constant 0 : i32
    %111 = arith.cmpi eq, %arg0, %c0_i32_44 : i32
    %112 = arith.extui %111 : i1 to i32
    %c0_i32_45 = arith.constant 0 : i32
    %113 = arith.cmpi ne, %112, %c0_i32_45 : i32
    scf.if %113 {
      %c0_46 = arith.constant 0 : index
      %c0_47 = arith.constant 0 : index
      %114 = vector.load %arg5[%c0_46, %c0_47] : memref<2x8xf32, #tpu.memory_space<vmem>>, vector<2x8xf32>
      %115 = vector.shape_cast %114 : vector<2x8xf32> to vector<1x2x8xf32>
      %cst_48 = arith.constant dense<0.000000e+00> : vector<1xf32>
      %116 = vector.multi_reduction <add>, %115, %cst_48 [1, 2] : vector<1x2x8xf32> to vector<1xf32>
      %117 = vector.shape_cast %116 : vector<1xf32> to vector<1x1x1xf32>
      %118 = vector.extract %117[0, 0, 0] : f32 from vector<1x1x1xf32>
      %119 = vector.broadcast %118 : f32 to vector<1x1xf32>
      %cst_49 = arith.constant 1.600000e+02 : f32
      %120 = vector.broadcast %cst_49 : f32 to vector<1x1xf32>
      %121 = arith.divf %119, %120 : vector<1x1xf32>
      %c0_50 = arith.constant 0 : index
      %c0_51 = arith.constant 0 : index
      %122 = vector.load %arg4[%c0_50, %c0_51] : memref<1x1xf32, #tpu.memory_space<vmem>>, vector<1x1xf32>
      tpu.vector_store %arg4[%c0_50, %c0_51], %121 {strides = array<i32>} : memref<1x1xf32, #tpu.memory_space<vmem>>, vector<1x1xf32>,
    } else {
    }
    return
  }
  func.func @transform_0(%arg0: i32) -> i32 {
    %c0_i32 = arith.constant 0 : i32
    %c0_i32_0 = arith.constant 0 : i32
    return %c0_i32 : i32
  }
  func.func @transform_1(%arg0: i32) -> i32 {
    %c0_i32 = arith.constant 0 : i32
    %c0_i32_0 = arith.constant 0 : i32
    return %c0_i32 : i32
  }
  func.func @transform_2(%arg0: i32) -> (i32, i32, i32, i32) {
    %c0_i32 = arith.constant 0 : i32
    %c0_i32_0 = arith.constant 0 : i32
    %c0_i32_1 = arith.constant 0 : i32
    %c0_i32_2 = arith.constant 0 : i32
    return %arg0, %c0_i32, %c0_i32_0, %c0_i32_1 : i32, i32, i32, i32
  }
  func.func @transform_3(%arg0: i32) -> (i32, i32) {
    %c0_i32 = arith.constant 0 : i32
    %c0_i32_0 = arith.constant 0 : i32
    %c0_i32_1 = arith.constant 0 : i32
    return %c0_i32, %c0_i32_0 : i32, i32
  }
}

</mosaic_0001>

<llo_original>
// kernel: tpu_custom_call.1
$region0: #{tpu_custom_call.1}
  #allocation0 [shape = 'u32[]', space=smem, size = 0x4, offset = 0x4, fixed_abs, tag = 'smem constant byte address 0x4 - core index']
  #allocation1 [shape = 'u32[72,128]{1,0:T(1,128)}', space=vmem, size = 0x9000, scoped, tag = 'internal scratch']
  #allocation2 [shape = 'f32[2,8]{1,0:T(2,128)}', space=vmem, size = 0x400, scoped, tag = 'scratch operand']
  %s0 = inlined_call_operand.hbm [shape: f32[16], index: 0, kind: input, shape index: {}]
  %s1 = inlined_call_operand.hbm [shape: f32[16], index: 1, kind: input, shape index: {}]
  %s2 = inlined_call_operand.hbm [shape: f32[2,4,8,32], index: 2, kind: input, shape index: {}]
  %s3 = inlined_call_operand.hbm [shape: f32[1,1], index: 3, kind: output, shape index: {}]
  %s4 = sld [smem:[#allocation0]]
  $region42: #{tpu_custom_call.1} parent=0
    _
  %s6 = ssub.s32 1, %s4
  %s7 = scalar_select 0, %s6, %s4
  $region1: #{tpu_custom_call.1} parent=0
    #allocation3 [shape = 'u8[512]{0}', space=smem, size = 0x200, scoped, tag = 'input window, operand 0, single buffered']
    #allocation4 [shape = 's32[1]{0}', space=sflag, size = 0x4, scoped, tag = 'scoped memory for tpu_custom_call.1']
    #allocation5 [shape = 's32[1]{0}', space=sflag, size = 0x4, scoped, tag = 'scoped memory for tpu_custom_call.1']
    #allocation6 [shape = 's32[1]{0}', space=sflag, size = 0x4, scoped, tag = 'scoped memory for tpu_custom_call.1']
    #allocation7 [shape = 'u8[512]{0}', space=smem, size = 0x200, scoped, tag = 'input window, operand 1, single buffered']
    #allocation8 [shape = 's32[1]{0}', space=sflag, size = 0x4, scoped, tag = 'scoped memory for tpu_custom_call.1']
    #allocation9 [shape = 'u8[32768]{0}', space=vmem, size = 0x8000, scoped, tag = 'input window, operand 2, single buffered']
    #allocation10 [shape = 'u8[512]{0}', space=vmem, size = 0x400, scoped, tag = 'output window, operand 0, single buffered']
    %8 = vsyncpa [#allocation6], 0
    %9 = vsyncpa [#allocation8], 0
    %10 = vsyncpa [#allocation4], 0
    %11 = vsyncpa [#allocation5], 0
    // Predicated region
    $region2: #{tpu_custom_call.1} parent=1 // pred_check
      _
    $region3: #{tpu_custom_call.1} parent=1 // pred_check_branch
      %13 = sbr.rel (0) target = $region5
    $region4: #{tpu_custom_call.1} parent=1 // pred_region
      %15 = vsyncadd [#allocation6], 0
      %s17 = sshll.u32 %s0, 4
      %s18 = int_to_ptr.hbm [resolvable:$true] %s17
      %20 = dma.hbm_to_smem %s18, 16, [#allocation3], [#allocation6]
    $region5: #{tpu_custom_call.1} parent=1 // pred_fallthru
      _
    // Predicated region
    $region6: #{tpu_custom_call.1} parent=1 // pred_check
      _
    $region7: #{tpu_custom_call.1} parent=1 // pred_check_branch
      %22 = sbr.rel (0) target = $region9
    $region8: #{tpu_custom_call.1} parent=1 // pred_region
      %24 = vsyncadd [#allocation8], 0
      %s26 = sshll.u32 %s1, 4
      %s27 = int_to_ptr.hbm [resolvable:$true] %s26
      %29 = dma.hbm_to_smem %s27, 16, [#allocation7], [#allocation8]
    $region9: #{tpu_custom_call.1} parent=1 // pred_fallthru
      _
    // Predicated region
    $region10: #{tpu_custom_call.1} parent=1 // pred_check
      _
    $region11: #{tpu_custom_call.1} parent=1 // pred_check_branch
      %31 = sbr.rel (0) target = $region13
    $region12: #{tpu_custom_call.1} parent=1 // pred_region
      %33 = vsyncadd [#allocation4], 0
      %s34 = sshll.u32 %s2, 4
      %s35 = int_to_ptr.hbm [resolvable:$true] %s34
      %s36 = sshll.u32 [#allocation9], 4
      %s37 = int_to_ptr.vmem [resolvable:$true] %s36
      %42 = dma.hbm_to_vmem [thread:$0]  %s35, 1024, %s37, [#allocation4], 128, 128, 8
    $region13: #{tpu_custom_call.1} parent=1 // pred_fallthru
      _
    // Predicated region
    $region14: #{tpu_custom_call.1} parent=1 // pred_check
      _
    $region15: #{tpu_custom_call.1} parent=1 // pred_check_branch
      %44 = sbr.rel (0) target = $region17
    $region16: #{tpu_custom_call.1} parent=1 // pred_region
      %46 = dma.done [#allocation6], 16
    $region17: #{tpu_custom_call.1} parent=1 // pred_fallthru
      _
    // Predicated region
    $region18: #{tpu_custom_call.1} parent=1 // pred_check
      _
    $region19: #{tpu_custom_call.1} parent=1 // pred_check_branch
      %48 = sbr.rel (0) target = $region21
    $region20: #{tpu_custom_call.1} parent=1 // pred_region
      %50 = dma.done [#allocation8], 16
    $region21: #{tpu_custom_call.1} parent=1 // pred_fallthru
      _
    // Predicated region
    $region22: #{tpu_custom_call.1} parent=1 // pred_check
      _
    $region23: #{tpu_custom_call.1} parent=1 // pred_check_branch
      %52 = sbr.rel (0) target = $region25
    $region24: #{tpu_custom_call.1} parent=1 // pred_region
      %54 = dma.done [#allocation4], 1024
    $region25: #{tpu_custom_call.1} parent=1 // pred_fallthru
      _
    %55 = sfence
    %p56 = scmp.eq.s32.totalorder 0, 0
    // Predicated region
    $region26: #{tpu_custom_call.1} parent=1 // pred_check
      %p57 = pneg %p56
    $region27: #{tpu_custom_call.1} parent=1 // pred_check_branch
      %59 = sbr.rel (%p57) target = $region29
    $region28: #{tpu_custom_call.1} parent=1 // pred_region
      %vm60 = vcmask 58368
      %61 = vst.msk [vmem:[#allocation2] sm:$0x3] %vm60, 0.0
    $region29: #{tpu_custom_call.1} parent=1 // pred_fallthru
      _
    %v62 = vld [vmem:[#allocation9] sm:$0xff]
    %v63 = vld [vmem:[#allocation9 + $0x20] sm:$0xff]
    %s64 = scalar_lea.vmem [#allocation9], 8
    %v65 = vld [vmem:[%s64] sm:$0xff]
    %v66 = vld [vmem:[%s64 + $0x20] sm:$0xff]
    %s67 = scalar_lea.vmem [#allocation9], 16
    %v68 = vld [vmem:[%s67] sm:$0xff]
    %v69 = vld [vmem:[%s67 + $0x20] sm:$0xff]
    %s70 = scalar_lea.vmem [#allocation9], 24
    %v71 = vld [vmem:[%s70] sm:$0xff]
    %v72 = vld [vmem:[%s70 + $0x20] sm:$0xff]
    %s73 = sld [smem:[#allocation3 + $0x1]]
    %s74 = sld [smem:[#allocation7 + $0x1]]
    %v75 = vsub.f32 %v62, %v65
    %v76 = vsub.f32 %v63, %v66
    %v77 = vmul.f32 %v75, %v75
    %v78 = vmul.f32 %v76, %v76
    %vm79 = vcmask 261120
    %v80 = vsel %vm79, %v77, 0.0
    %81 = vadd.xlane.f32.xlu0 %v80
    %v82 = vpop.xlane.xlu0 %81
    %v83 = vsel %vm79, %v78, 0.0
    %84 = vadd.xlane.f32.xlu0 %v83
    %v85 = vpop.xlane.xlu0 %84
    %v86 = vrsqrt.pop %v82
    %v87 = vmul.f32 %v86, %v82
    %v88 = vmul.f32 %v87, %v86
    %v89 = vmul.f32 0.5, %v88
    %v90 = vsub.f32 1.5, %v89
    %v91 = vmul.f32 %v86, %v90
    %v92 = vmul.f32 %v82, %v91
    %vm93 = vcmp.eq.f32.partialorder %v82, inf
    %v94 = vsel %vm93, %v82, %v92
    %vm95 = vcmp.eq.f32.partialorder %v82, 0.0
    %v96 = vand.u32 %v82, 2147483648
    %v97 = vsel %vm95, %v96, %v94
    %v98 = vrsqrt.pop %v85
    %v99 = vmul.f32 %v98, %v85
    %v100 = vmul.f32 %v99, %v98
    %v101 = vmul.f32 0.5, %v100
    %v102 = vsub.f32 1.5, %v101
    %v103 = vmul.f32 %v98, %v102
    %v104 = vmul.f32 %v85, %v103
    %vm105 = vcmp.eq.f32.partialorder %v85, inf
    %v106 = vsel %vm105, %v85, %v104
    %vm107 = vcmp.eq.f32.partialorder %v85, 0.0
    %v108 = vand.u32 %v85, 2147483648
    %v109 = vsel %vm107, %v108, %v106
    %v110 = vstv %s73
    %v111 = vmul.f32 %v110, %v97
    %v112 = vmul.f32 %v110, %v109
    %v113 = vsub.f32 1.0, %v97
    %v114 = vsub.f32 1.0, %v109
    %v115 = vmax.f32 %v113, 0.0
    %v116 = vmax.f32 %v114, 0.0
    %v117 = vstv %s74
    %v118 = vmul.f32 %v117, %v115
    %v119 = vmul.f32 %v117, %v116
    %v120 = vadd.f32 %v111, %v118
    %v121 = vadd.f32 %v112, %v119
    %v122 = vadd.f32 %v120, 0.0
    %v123 = vadd.f32 %v121, 0.0
    %s124 = sld [smem:[#allocation3 + $0x2]]
    %s125 = sld [smem:[#allocation7 + $0x2]]
    %v126 = vsub.f32 %v62, %v68
    %v127 = vsub.f32 %v63, %v69
    %v128 = vmul.f32 %v126, %v126
    %v129 = vmul.f32 %v127, %v127
    %v130 = vsel %vm79, %v128, 0.0
    %131 = vadd.xlane.f32.xlu0 %v130
    %v132 = vpop.xlane.xlu0 %131
    %v133 = vsel %vm79, %v129, 0.0
    %134 = vadd.xlane.f32.xlu0 %v133
    %v135 = vpop.xlane.xlu0 %134
    %v136 = vrsqrt.pop %v132
    %v137 = vmul.f32 %v136, %v132
    %v138 = vmul.f32 %v137, %v136
    %v139 = vmul.f32 0.5, %v138
    %v140 = vsub.f32 1.5, %v139
    %v141 = vmul.f32 %v136, %v140
    %v142 = vmul.f32 %v132, %v141
    %vm143 = vcmp.eq.f32.partialorder %v132, inf
    %v144 = vsel %vm143, %v132, %v142
    %vm145 = vcmp.eq.f32.partialorder %v132, 0.0
    %v146 = vand.u32 %v132, 2147483648
    %v147 = vsel %vm145, %v146, %v144
    %v148 = vrsqrt.pop %v135
    %v149 = vmul.f32 %v148, %v135
    %v150 = vmul.f32 %v149, %v148
    %v151 = vmul.f32 0.5, %v150
    %v152 = vsub.f32 1.5, %v151
    %v153 = vmul.f32 %v148, %v152
    %v154 = vmul.f32 %v135, %v153
    %vm155 = vcmp.eq.f32.partialorder %v135, inf
    %v156 = vsel %vm155, %v135, %v154
    %vm157 = vcmp.eq.f32.partialorder %v135, 0.0
    %v158 = vand.u32 %v135, 2147483648
    %v159 = vsel %vm157, %v158, %v156
    %v160 = vstv %s124
    %v161 = vmul.f32 %v160, %v147
    %v162 = vmul.f32 %v160, %v159
    %v163 = vsub.f32 1.0, %v147
    %v164 = vsub.f32 1.0, %v159
    %v165 = vmax.f32 %v163, 0.0
    %v166 = vmax.f32 %v164, 0.0
    %v167 = vstv %s125
    %v168 = vmul.f32 %v167, %v165
    %v169 = vmul.f32 %v167, %v166
    %v170 = vadd.f32 %v161, %v168
    %v171 = vadd.f32 %v162, %v169
    %v172 = vadd.f32 %v122, %v170
    %v173 = vadd.f32 %v123, %v171
    %s174 = sld [smem:[#allocation3 + $0x3]]
    %s175 = sld [smem:[#allocation7 + $0x3]]
    %v176 = vsub.f32 %v62, %v71
    %v177 = vsub.f32 %v63, %v72
    %v178 = vmul.f32 %v176, %v176
    %v179 = vmul.f32 %v177, %v177
    %v180 = vsel %vm79, %v178, 0.0
    %181 = vadd.xlane.f32.xlu0 %v180
    %v182 = vpop.xlane.xlu0 %181
    %v183 = vsel %vm79, %v179, 0.0
    %184 = vadd.xlane.f32.xlu0 %v183
    %v185 = vpop.xlane.xlu0 %184
    %v186 = vrsqrt.pop %v182
    %v187 = vmul.f32 %v186, %v182
    %v188 = vmul.f32 %v187, %v186
    %v189 = vmul.f32 0.5, %v188
    %v190 = vsub.f32 1.5, %v189
    %v191 = vmul.f32 %v186, %v190
    %v192 = vmul.f32 %v182, %v191
    %vm193 = vcmp.eq.f32.partialorder %v182, inf
    %v194 = vsel %vm193, %v182, %v192
    %vm195 = vcmp.eq.f32.partialorder %v182, 0.0
    %v196 = vand.u32 %v182, 2147483648
    %v197 = vsel %vm195, %v196, %v194
    %v198 = vrsqrt.pop %v185
    %v199 = vmul.f32 %v198, %v185
    %v200 = vmul.f32 %v199, %v198
    %v201 = vmul.f32 0.5, %v200
    %v202 = vsub.f32 1.5, %v201
    %v203 = vmul.f32 %v198, %v202
    %v204 = vmul.f32 %v185, %v203
    %vm205 = vcmp.eq.f32.partialorder %v185, inf
    %v206 = vsel %vm205, %v185, %v204
    %vm207 = vcmp.eq.f32.partialorder %v185, 0.0
    %v208 = vand.u32 %v185, 2147483648
    %v209 = vsel %vm207, %v208, %v206
    %v210 = vstv %s174
    %v211 = vmul.f32 %v210, %v197
    %v212 = vmul.f32 %v210, %v209
    %v213 = vsub.f32 1.0, %v197
    %v214 = vsub.f32 1.0, %v209
    %v215 = vmax.f32 %v213, 0.0
    %v216 = vmax.f32 %v214, 0.0
    %v217 = vstv %s175
    %v218 = vmul.f32 %v217, %v215
    %v219 = vmul.f32 %v217, %v216
    %v220 = vadd.f32 %v211, %v218
    %v221 = vadd.f32 %v212, %v219
    %v222 = vadd.f32 %v172, %v220
    %v223 = vadd.f32 %v173, %v221
    %s224 = sld [smem:[#allocation3 + $0x6]]
    %s225 = sld [smem:[#allocation7 + $0x6]]
    %v226 = vsub.f32 %v65, %v68
    %v227 = vsub.f32 %v66, %v69
    %v228 = vmul.f32 %v226, %v226
    %v229 = vmul.f32 %v227, %v227
    %v230 = vsel %vm79, %v228, 0.0
    %231 = vadd.xlane.f32.xlu0 %v230
    %v232 = vpop.xlane.xlu0 %231
    %v233 = vsel %vm79, %v229, 0.0
    %234 = vadd.xlane.f32.xlu0 %v233
    %v235 = vpop.xlane.xlu0 %234
    %v236 = vrsqrt.pop %v232
    %v237 = vmul.f32 %v236, %v232
    %v238 = vmul.f32 %v237, %v236
    %v239 = vmul.f32 0.5, %v238
    %v240 = vsub.f32 1.5, %v239
    %v241 = vmul.f32 %v236, %v240
    %v242 = vmul.f32 %v232, %v241
    %vm243 = vcmp.eq.f32.partialorder %v232, inf
    %v244 = vsel %vm243, %v232, %v242
    %vm245 = vcmp.eq.f32.partialorder %v232, 0.0
    %v246 = vand.u32 %v232, 2147483648
    %v247 = vsel %vm245, %v246, %v244
    %v248 = vrsqrt.pop %v235
    %v249 = vmul.f32 %v248, %v235
    %v250 = vmul.f32 %v249, %v248
    %v251 = vmul.f32 0.5, %v250
    %v252 = vsub.f32 1.5, %v251
    %v253 = vmul.f32 %v248, %v252
    %v254 = vmul.f32 %v235, %v253
    %vm255 = vcmp.eq.f32.partialorder %v235, inf
    %v256 = vsel %vm255, %v235, %v254
    %vm257 = vcmp.eq.f32.partialorder %v235, 0.0
    %v258 = vand.u32 %v235, 2147483648
    %v259 = vsel %vm257, %v258, %v256
    %v260 = vstv %s224
    %v261 = vmul.f32 %v260, %v247
    %v262 = vmul.f32 %v260, %v259
    %v263 = vsub.f32 1.0, %v247
    %v264 = vsub.f32 1.0, %v259
    %v265 = vmax.f32 %v263, 0.0
    %v266 = vmax.f32 %v264, 0.0
    %v267 = vstv %s225
    %v268 = vmul.f32 %v267, %v265
    %v269 = vmul.f32 %v267, %v266
    %v270 = vadd.f32 %v261, %v268
    %v271 = vadd.f32 %v262, %v269
    %v272 = vadd.f32 %v222, %v270
    %v273 = vadd.f32 %v223, %v271
    %s274 = sld [smem:[#allocation3 + $0x7]]
    %s275 = sld [smem:[#allocation7 + $0x7]]
    %v276 = vsub.f32 %v65, %v71
    %v277 = vsub.f32 %v66, %v72
    %v278 = vmul.f32 %v276, %v276
    %v279 = vmul.f32 %v277, %v277
    %v280 = vsel %vm79, %v278, 0.0
    %281 = vadd.xlane.f32.xlu0 %v280
    %v282 = vpop.xlane.xlu0 %281
    %v283 = vsel %vm79, %v279, 0.0
    %284 = vadd.xlane.f32.xlu0 %v283
    %v285 = vpop.xlane.xlu0 %284
    %v286 = vrsqrt.pop %v282
    %v287 = vmul.f32 %v286, %v282
    %v288 = vmul.f32 %v287, %v286
    %v289 = vmul.f32 0.5, %v288
    %v290 = vsub.f32 1.5, %v289
    %v291 = vmul.f32 %v286, %v290
    %v292 = vmul.f32 %v282, %v291
    %vm293 = vcmp.eq.f32.partialorder %v282, inf
    %v294 = vsel %vm293, %v282, %v292
    %vm295 = vcmp.eq.f32.partialorder %v282, 0.0
    %v296 = vand.u32 %v282, 2147483648
    %v297 = vsel %vm295, %v296, %v294
    %v298 = vrsqrt.pop %v285
    %v299 = vmul.f32 %v298, %v285
    %v300 = vmul.f32 %v299, %v298
    %v301 = vmul.f32 0.5, %v300
    %v302 = vsub.f32 1.5, %v301
    %v303 = vmul.f32 %v298, %v302
    %v304 = vmul.f32 %v285, %v303
    %vm305 = vcmp.eq.f32.partialorder %v285, inf
    %v306 = vsel %vm305, %v285, %v304
    %vm307 = vcmp.eq.f32.partialorder %v285, 0.0
    %v308 = vand.u32 %v285, 2147483648
    %v309 = vsel %vm307, %v308, %v306
    %v310 = vstv %s274
    %v311 = vmul.f32 %v310, %v297
    %v312 = vmul.f32 %v310, %v309
    %v313 = vsub.f32 1.0, %v297
    %v314 = vsub.f32 1.0, %v309
    %v315 = vmax.f32 %v313, 0.0
    %v316 = vmax.f32 %v314, 0.0
    %v317 = vstv %s275
    %v318 = vmul.f32 %v317, %v315
    %v319 = vmul.f32 %v317, %v316
    %v320 = vadd.f32 %v311, %v318
    %v321 = vadd.f32 %v312, %v319
    %v322 = vadd.f32 %v272, %v320
    %v323 = vadd.f32 %v273, %v321
    %s324 = sld [smem:[#allocation3 + $0xb]]
    %s325 = sld [smem:[#allocation7 + $0xb]]
    %v326 = vsub.f32 %v68, %v71
    %v327 = vsub.f32 %v69, %v72
    %v328 = vmul.f32 %v326, %v326
    %v329 = vmul.f32 %v327, %v327
    %v330 = vsel %vm79, %v328, 0.0
    %331 = vadd.xlane.f32.xlu0 %v330
    %v332 = vpop.xlane.xlu0 %331
    %v333 = vsel %vm79, %v329, 0.0
    %334 = vadd.xlane.f32.xlu0 %v333
    %v335 = vpop.xlane.xlu0 %334
    %v336 = vrsqrt.pop %v332
    %v337 = vmul.f32 %v336, %v332
    %v338 = vmul.f32 %v337, %v336
    %v339 = vmul.f32 0.5, %v338
    %v340 = vsub.f32 1.5, %v339
    %v341 = vmul.f32 %v336, %v340
    %v342 = vmul.f32 %v332, %v341
    %vm343 = vcmp.eq.f32.partialorder %v332, inf
    %v344 = vsel %vm343, %v332, %v342
    %vm345 = vcmp.eq.f32.partialorder %v332, 0.0
    %v346 = vand.u32 %v332, 2147483648
    %v347 = vsel %vm345, %v346, %v344
    %v348 = vrsqrt.pop %v335
    %v349 = vmul.f32 %v348, %v335
    %v350 = vmul.f32 %v349, %v348
    %v351 = vmul.f32 0.5, %v350
    %v352 = vsub.f32 1.5, %v351
    %v353 = vmul.f32 %v348, %v352
    %v354 = vmul.f32 %v335, %v353
    %vm355 = vcmp.eq.f32.partialorder %v335, inf
    %v356 = vsel %vm355, %v335, %v354
    %vm357 = vcmp.eq.f32.partialorder %v335, 0.0
    %v358 = vand.u32 %v335, 2147483648
    %v359 = vsel %vm357, %v358, %v356
    %v360 = vstv %s324
    %v361 = vmul.f32 %v360, %v347
    %v362 = vmul.f32 %v360, %v359
    %v363 = vsub.f32 1.0, %v347
    %v364 = vsub.f32 1.0, %v359
    %v365 = vmax.f32 %v363, 0.0
    %v366 = vmax.f32 %v364, 0.0
    %v367 = vstv %s325
    %v368 = vmul.f32 %v367, %v365
    %v369 = vmul.f32 %v367, %v366
    %v370 = vadd.f32 %v361, %v368
    %v371 = vadd.f32 %v362, %v369
    %v372 = vadd.f32 %v322, %v370
    %v373 = vadd.f32 %v323, %v371
    %v374 = vld [vmem:[#allocation2] sm:$0x3]
    %v377 = vlaneseq
    %v378 = vand.u32 %v377, 127
    %v379 = vperm.slane %v372, %v378
    %v380 = vperm.slane %v373, %v378
    %vm381 = vcmask 1041409
    %v382 = vsel %vm381, %v380, %v379
    %v384 = vadd.f32 %v374, %v382
    %vm385 = vcmask 58368
    %386 = vst.msk [vmem:[#allocation2] sm:$0x3] %vm385, %v384
    // Predicated region
    $region30: #{tpu_custom_call.1} parent=1 // pred_check
      %p387 = pneg %p56
    $region31: #{tpu_custom_call.1} parent=1 // pred_check_branch
      %389 = sbr.rel (%p387) target = $region33
    $region32: #{tpu_custom_call.1} parent=1 // pred_region
      %v390 = vld [vmem:[#allocation2] sm:$0x3]
      %v391 = vsel %vm385, %v390, 0.0
      %392 = vadd.xlane.f32.xlu0 %v391
      %v393 = vpop.xlane.xlu0 %392
      %v394 = vrot.slane %v393, 4
      %v395 = vadd.f32 %v393, %v394
      %v396 = vrot.slane %v395, 2
      %v397 = vadd.f32 %v395, %v396
      %v398 = vrot.slane %v397, 1
      %v399 = vadd.f32 %v397, %v398
      %s400 = vtos %v399
      %v401 = vstv %s400
      %v402 = vrcp.pop 160.0
      %v403 = vmul.f32 160.0, %v402
      %v404 = vsub.f32 1.0, %v403
      %v405 = vmul.f32 %v402, %v404
      %v406 = vadd.f32 %v402, %v405
      %vm407 = vweird.f32 %v402
      %v408 = vsel %vm407, %v402, %v406
      %v409 = vmul.f32 %v401, %v408
      %vm410 = vcmask 0
      %411 = vst.msk [vmem:[#allocation10] sm:$0x1] %vm410, %v409
    $region33: #{tpu_custom_call.1} parent=1 // pred_fallthru
      _
    // Predicated region
    $region34: #{tpu_custom_call.1} parent=1 // pred_check
      _
    $region35: #{tpu_custom_call.1} parent=1 // pred_check_branch
      %413 = sbr.rel (0) target = $region37
    $region36: #{tpu_custom_call.1} parent=1 // pred_region
      %415 = vsyncadd [#allocation5], 0
      %s417 = sshll.u32 [#allocation10], 4
      %s418 = int_to_ptr.vmem [resolvable:$true] %s417
      %s419 = sshll.u32 %s3, 4
      %s420 = int_to_ptr.hbm [resolvable:$true] %s419
      %422 = dma.vmem_to_hbm [thread:$0]  %s418, 16, %s420, [#allocation5]
    $region37: #{tpu_custom_call.1} parent=1 // pred_fallthru
      _
    // Predicated region
    $region38: #{tpu_custom_call.1} parent=1 // pred_check
      _
    $region39: #{tpu_custom_call.1} parent=1 // pred_check_branch
      %424 = sbr.rel (0) target = $region41
    $region40: #{tpu_custom_call.1} parent=1 // pred_region
      %426 = dma.done [#allocation5], 16
    $region41: #{tpu_custom_call.1} parent=1 // pred_fallthru
      _
    %427 = vsyncpa [#allocation4], 1
    %428 = vsyncpa [#allocation5], 1
    %429 = vsyncpa [#allocation6], 1
    %430 = vsyncpa [#allocation8], 1

</llo_original>
